<compile_context>
chip_gen: v7x
topology: tpu7x:2x2x1
jax: 0.10.0
libtpu: 0.0.40
codegen_flags: <defaults>
</compile_context>

<pallas_src>
import numpy as np
import jax
import jax.numpy as jnp
from jax.experimental import pallas as pl
from jax.experimental.pallas import tpu as pltpu

# ---- configuration (mirrors VectorQuantizer.__init__ args) -------------------
NUM_EMBEDDINGS = 32     # args.num_embeddings (K)
EMBEDDING_DIM  = 16     # args.embedding_dim == input channels C (quantize='spatial')
CODEBOOK_DIM   = 8      # args.codebook_dim (D) != E  -> project_in / project_out active
BETA           = 0.25   # commitment cost
LN_EPS         = 1e-5   # nn.LayerNorm default eps

MAX_TILE_T     = 512    # largest lane tile that stays register-resident (no spills)
MIN_GRID_STEPS = 4      # >= 2 grid steps per TensorCore after v7x megacore split

HIGHEST = jax.lax.Precision.HIGHEST


# --------------------------- parameter packing --------------------------------
def _prepare_kernel_params(p):
    """Fold project_out + norm_out into a (K, E) LUT (exact: the post-argmin path is
    a pure function of the selected code) and pack every small parameter into one
    (rows, 128) f32 slab with 8-row-aligned bands."""
    E = p["w1"].shape[0]
    K, D = p["cb"].shape
    cb = p["cb"]

    # out_table[k] = norm_out(project_out(cb[k]))
    h2 = jnp.maximum(jnp.dot(cb, p["w3"], precision=HIGHEST,
                             preferred_element_type=jnp.float32) + p["b3"], 0.0)
    o = jnp.dot(h2, p["w4"], precision=HIGHEST,
                preferred_element_type=jnp.float32) + p["b4"]
    mu = jnp.mean(o, axis=-1, keepdims=True)
    var = jnp.mean(jnp.square(o - mu), axis=-1, keepdims=True)
    lut_t = ((o - mu) * jax.lax.rsqrt(var + LN_EPS) * p["g_out"] + p["bt_out"]).T  # (E, K)

    # hi/lo split so the in-kernel LUT select is exact with two bf16 MXU passes
    lut_hi = lut_t.astype(jnp.bfloat16).astype(jnp.float32)
    lut_lo = lut_t - lut_hi

    parts = [
        ("w1t",    p["w1"].T),                               # (E, E)
        ("b1",     p["b1"].reshape(E, 1)),
        ("w2t",    p["w2"].T),                               # (D, E)
        ("b2",     p["b2"].reshape(D, 1)),
        ("g_in",   p["g_in"].reshape(D, 1)),
        ("bt_in",  p["bt_in"].reshape(D, 1)),
        ("lut_hi", lut_hi),                                  # (E, K)
        ("lut_lo", lut_lo),                                  # (E, K)
        ("cb2",    -2.0 * cb),                               # fold -2 of -2*<f, e_k>
        ("cb_sq",  jnp.sum(cb * cb, axis=-1, keepdims=True)),  # (K, 1)
    ]
    offs, blocks, row = {}, [], 0
    for name, a in parts:
        a = a.astype(jnp.float32)
        r, c = a.shape
        rpad = -(-r // 8) * 8                                # 8-row aligned band
        offs[name] = (row, r, c)
        blocks.append(jnp.zeros((rpad, 128), jnp.float32).at[:r, :c].set(a))
        row += rpad
    return jnp.concatenate(blocks, axis=0), offs


# ---------------------------- Pallas kernel -----------------------------------
def _make_vq_kernel(offs, K):
    def kernel(x_ref, p_ref, q_ref, idx_ref):
        def band(name, dtype=None):
            r0, r, c = offs[name]                            # static slice of the slab
            v = p_ref[r0:r0 + r, 0:c]
            return v if dtype is None else v.astype(dtype)

        bf16 = jnp.bfloat16
        x = x_ref[0].astype(bf16)                            # (E, TM) channel-major

        # project_in: Linear(E,E) -> ReLU -> Linear(E,D).  Feeds only the argmin,
        # so single native bf16 MXU passes (f32 accumulate) are enough.
        h = jnp.maximum(jnp.dot(band("w1t", bf16), x,
                                preferred_element_type=jnp.float32) + band("b1"), 0.0)
        f = jnp.dot(band("w2t", bf16), h.astype(bf16),
                    preferred_element_type=jnp.float32) + band("b2")       # (D, TM)

        # norm_in: LayerNorm over codebook_dim, one-pass variance
        mu = jnp.mean(f, axis=0, keepdims=True)
        var = jnp.maximum(jnp.mean(f * f, axis=0, keepdims=True) - mu * mu, 0.0)
        f = (f - mu) * jax.lax.rsqrt(var + LN_EPS) * band("g_in") + band("bt_in")

        # distances (argmin-invariant proxy, per-token ||f||^2 dropped):
        #   d_k = ||e_k||^2 - 2 <e_k, f>
        dist = jnp.dot(band("cb2", bf16), f.astype(bf16),
                       preferred_element_type=jnp.float32) + band("cb_sq")  # (K, TM)

        # first-min index (matches torch.min tie-break).
        # TODO(synk): a fused variadic (value,index) argmin reduce would save one
        # cross-sublane pass; kept as two min-reductions for guaranteed lowering.
        min_d = jnp.min(dist, axis=0, keepdims=True)                        # (1, TM)
        iota_k = jax.lax.broadcasted_iota(jnp.int32, dist.shape, 0)         # (K, TM)
        idx = jnp.min(jnp.where(dist == min_d, iota_k, K),
                      axis=0, keepdims=True)                                # (1, TM)

        # folded project_out+norm_out lookup: exact select via hi/lo bf16 matmuls
        onehot = (iota_k == idx).astype(bf16)                               # (K, TM)
        q_ref[0] = (jnp.dot(band("lut_hi", bf16), onehot,
                            preferred_element_type=jnp.float32)
                    + jnp.dot(band("lut_lo", bf16), onehot,
                              preferred_element_type=jnp.float32))          # (E, TM)
        idx_ref[0] = idx.astype(jnp.int32)                                  # (1, TM)

    return kernel


def _pick_tile_t(T, B, max_tile=MAX_TILE_T, min_steps=MIN_GRID_STEPS):
    """Largest multiple-of-128 divisor of T that is <= max_tile while keeping the
    grid at >= min_steps steps; full-extent block when T is not 128-aligned."""
    if T % 128 != 0:
        return T
    divs = [d for d in range(128, min(T, max_tile) + 1, 128) if T % d == 0]
    ok = [d for d in divs if B * (T // d) >= min_steps]
    return max(ok) if ok else min(divs)


def vq_core(x_bct, p):
    """Fused VQ over channel-major tokens.  x_bct: (B, E, T) float32.
    Returns (quantized (B, E, T) f32, indices (B, 1, T) i32)."""
    B, E, T = x_bct.shape
    K, _ = p["cb"].shape
    slab, offs = _prepare_kernel_params(p)

    tile_t = _pick_tile_t(T, B)
    grid = (B, T // tile_t)

    return pl.pallas_call(
        _make_vq_kernel(offs, K),
        out_shape=[jax.ShapeDtypeStruct((B, E, T), jnp.float32),
                   jax.ShapeDtypeStruct((B, 1, T), jnp.int32)],
        grid_spec=pltpu.PrefetchScalarGridSpec(
            num_scalar_prefetch=0,
            grid=grid,
            in_specs=[
                pl.BlockSpec((1, E, tile_t), lambda b, t: (b, 0, t)),   # tokens
                pl.BlockSpec(slab.shape, lambda b, t: (0, 0)),          # packed params
            ],
            out_specs=[
                pl.BlockSpec((1, E, tile_t), lambda b, t: (b, 0, t)),   # quantized
                pl.BlockSpec((1, 1, tile_t), lambda b, t: (b, 0, t)),   # indices
            ]),
        compiler_params=pltpu.CompilerParams(
            dimension_semantics=("parallel", "parallel")),
    )(x_bct, slab)


# ------------------------------ JAX glue --------------------------------------
def get_cb_variance_masked(cb, idx_flat):
    # TODO(synk): get_cb_variance's body is not in the provided source; this is the
    # standard implementation (1 - mean row-variance of the pairwise cosine-distance
    # matrix over the USED codes) with a static-shape mask so the forward stays
    # jittable (no jnp.unique / host round-trip).
    K = cb.shape[0]
    counts = jnp.zeros((K,), jnp.float32).at[idx_flat].add(1.0)
    m = (counts > 0).astype(jnp.float32)
    n = jnp.sum(m)
    cbn = cb / (jnp.linalg.norm(cb, axis=-1, keepdims=True) + 1e-10)
    cd = 1.0 - cbn @ cbn.T
    row_mean = jnp.sum(cd * m[None, :], axis=1) / n
    sq = jnp.sum(jnp.square(cd - row_mean[:, None]) * m[None, :], axis=1)
    var = sq / jnp.maximum(n - 1.0, 1.0)
    return 1.0 - jnp.sum(var * m) / n


def vector_quantizer_forward(inputs, labels, params, *, commitment_cost=BETA):
    """Inference forward of VectorQuantizer (training=False, update=False, idxs=None)."""
    del labels  # unused by the reference forward
    B, C, H, W = inputs.shape
    T = H * W
    K = params["cb"].shape[0]

    # NCHW -> (B, C, T) is a free view; the kernel works channel-major / lane-dense.
    x_bct = inputs.reshape(B, C, T)
    q_bct, idx = vq_core(x_bct, params)
    quantized = q_bct.reshape(B, C, H, W)

    # compute_baseloss (loss_type=0): q_latent + beta * e_latent
    e_latent = jnp.mean((jax.lax.stop_gradient(quantized) - inputs) ** 2)
    q_latent = jnp.mean((quantized - jax.lax.stop_gradient(inputs)) ** 2)
    loss = q_latent + commitment_cost * e_latent
    loss = loss + get_cb_variance_masked(params["cb"], idx.reshape(-1))

    # straight-through estimator
    quantized = inputs + jax.lax.stop_gradient(quantized - inputs)

    # perplexity: torch averages the (B, T, K) one-hot encodings over the batch axis
    # only, then means over (T, K).  Reproduce that exactly from scatter-added
    # per-position counts (no (B, T, K) f32 one-hot in HBM).
    idx_bt = idx.reshape(B, T)
    counts_tk = jnp.zeros((T, K), jnp.float32).at[
        jnp.arange(T)[None, :], idx_bt].add(1.0)
    avg_probs = counts_tk / B
    perplexity = jnp.exp(-jnp.mean(avg_probs * jnp.log(avg_probs + 1e-10)))

    return quantized, idx_bt, loss, perplexity


# ---------------------- deterministic parameter init --------------------------
def init_params(key):
    E, D, K = EMBEDDING_DIM, CODEBOOK_DIM, NUM_EMBEDDINGS
    ks = jax.random.split(key, 5)

    def linear(k, fan_in, fan_out):
        kw, kb = jax.random.split(k)
        bound = 1.0 / np.sqrt(fan_in)
        w = jax.random.uniform(kw, (fan_in, fan_out), jnp.float32, -bound, bound)
        b = jax.random.uniform(kb, (1, fan_out), jnp.float32, -bound, bound)
        return w, b

    w1, b1 = linear(ks[0], E, E)   # project_in[0]
    w2, b2 = linear(ks[1], E, D)   # project_in[2]
    w3, b3 = linear(ks[2], D, E)   # project_out[0]
    w4, b4 = linear(ks[3], E, E)   # project_out[2]
    cb = jax.random.normal(ks[4], (K, D), jnp.float32)  # nn.Embedding default N(0,1)
    return dict(
        w1=w1, b1=b1, w2=w2, b2=b2,
        g_in=jnp.ones((1, D), jnp.float32), bt_in=jnp.zeros((1, D), jnp.float32),
        cb=cb,
        w3=w3, b3=b3, w4=w4, b4=b4,
        g_out=jnp.ones((1, E), jnp.float32), bt_out=jnp.zeros((1, E), jnp.float32),
    )


# --------------------------- pure-JAX reference --------------------------------
def _reference_core(x_tok, p):
    """Token-major reference.  The argmin path mirrors the kernel's single-pass bf16
    matmuls (operands rounded identically); the output path is full-precision."""
    bf16 = jnp.bfloat16

    def bdot(a, b):
        return jnp.dot(a.astype(bf16), b.astype(bf16),
                       preferred_element_type=jnp.float32)

    def hdot(a, b):
        return jnp.dot(a, b, precision=HIGHEST, preferred_element_type=jnp.float32)

    h = jnp.maximum(bdot(x_tok, p["w1"]) + p["b1"], 0.0)
    f = bdot(h, p["w2"]) + p["b2"]
    mu = jnp.mean(f, axis=-1, keepdims=True)
    var = jnp.mean((f - mu) ** 2, axis=-1, keepdims=True)
    f = (f - mu) * jax.lax.rsqrt(var + LN_EPS) * p["g_in"] + p["bt_in"]

    cb = p["cb"]
    dist = (jnp.sum(f * f, -1, keepdims=True) + jnp.sum(cb * cb, -1)[None, :]
            - 2.0 * bdot(f, cb.T))
    K = cb.shape[0]
    min_d = jnp.min(dist, axis=-1, keepdims=True)
    iota = jnp.arange(K, dtype=jnp.int32)[None, :]
    idx = jnp.min(jnp.where(dist == min_d, iota, K), axis=-1,
                  keepdims=True).astype(jnp.int32)

    onehot = (idx == iota).astype(jnp.float32)
    quant = hdot(onehot, cb)
    h2 = jnp.maximum(hdot(quant, p["w3"]) + p["b3"], 0.0)
    qo = hdot(h2, p["w4"]) + p["b4"]
    mu2 = jnp.mean(qo, axis=-1, keepdims=True)
    var2 = jnp.mean((qo - mu2) ** 2, axis=-1, keepdims=True)
    qo = (qo - mu2) * jax.lax.rsqrt(var2 + LN_EPS) * p["g_out"] + p["bt_out"]
    return qo, idx, dist


# ---------------------------------- main ---------------------------------------
if __name__ == "__main__":
    key = jax.random.PRNGKey(0)
    k_param, kx, kl = jax.random.split(key, 3)
    params = init_params(k_param)

    B, H, W = 2, 16, 16
    inputs = jax.random.normal(kx, (B, EMBEDDING_DIM, H, W), jnp.float32)  # NCHW
    labels = jax.random.randint(kl, (B,), 0, 5)                            # unused by forward

    fwd = jax.jit(vector_quantizer_forward)
    quantized, enc_idx, loss, perplexity = fwd(inputs, labels, params)
    jax.block_until_ready((quantized, enc_idx, loss, perplexity))

    # correctness check of the Pallas hot path against the pure-JAX reference
    T = H * W
    x_bct = inputs.reshape(B, EMBEDDING_DIM, T)
    q_k_bct, idx_k = jax.block_until_ready(vq_core(x_bct, params))
    q_k = np.asarray(jnp.transpose(q_k_bct, (0, 2, 1)).reshape(-1, EMBEDDING_DIM))
    i_k = np.asarray(idx_k).reshape(-1)

    x_tok = jnp.transpose(x_bct, (0, 2, 1)).reshape(-1, EMBEDDING_DIM)
    q_r, i_r, d_r = _reference_core(x_tok, params)
    q_r = np.asarray(q_r); i_r = np.asarray(i_r).reshape(-1); d_r = np.asarray(d_r)

    same = i_k == i_r
    assert same.mean() > 0.99, f"index mismatch fraction {1 - same.mean():.4f}"
    if not same.all():
        rows = np.nonzero(~same)[0]
        gap = np.abs(d_r[rows, i_k[rows]] - d_r[rows, i_r[rows]])
        assert float(gap.max()) < 0.05, f"non-tie index mismatch, max gap {gap.max():.4g}"
    np.testing.assert_allclose(q_k[same], q_r[same], rtol=1e-4, atol=1e-4)

    assert quantized.shape == inputs.shape
    assert enc_idx.shape == (B, T)
    assert np.isfinite(float(loss)) and np.isfinite(float(perplexity))

    print("KERNEL_OK")
</pallas_src>

<mosaic_0001>
module attributes {stable_mosaic.version = 11 : i64} {
  func.func private @main(%arg0: i32) attributes {dimension_semantics = [#tpu.dimension_semantics<core_parallel>], iteration_bounds = array<i64: 2>, tpu.core_type = #tpu.core_type<sc_scalar_subcore>, window_params = []} {
    return
  }
}

module attributes {stable_mosaic.version = 11 : i64} {
  func.func private @main(%arg0: i32) attributes {dimension_semantics = [#tpu.dimension_semantics<core_parallel>], iteration_bounds = array<i64: 2>, tpu.core_type = #tpu.core_type<sc_scalar_subcore>, window_params = []} {
    return
  }
}

module attributes {stable_mosaic.version = 11 : i64} {
  func.func @kernel(%arg0: i32, %arg1: i32, %arg2: memref<1x16x128xf32, #tpu.memory_space<vmem>>, %arg3: memref<160x128xf32, #tpu.memory_space<vmem>>, %arg4: memref<1x16x128xf32, #tpu.memory_space<vmem>>, %arg5: memref<1x1x128xi32, #tpu.memory_space<vmem>>) attributes {dimension_semantics = [#tpu.dimension_semantics<parallel>, #tpu.dimension_semantics<parallel>], iteration_bounds = array<i64: 2, 2>, scalar_prefetch = 0 : i64, scratch_operands = 0 : i64, tpu.core_type = #tpu.core_type<tc>, window_params = [{transform_indices = @transform_0, window_bounds = array<i64: 1, 16, 128>}, {pipeline_mode = #tpu.pipeline_mode<synchronous>, transform_indices = @transform_1, window_bounds = array<i64: 160, 128>}, {transform_indices = @transform_2, window_bounds = array<i64: 1, 16, 128>}, {transform_indices = @transform_3, window_bounds = array<i64: 1, 1, 128>}]} {
    %c0 = arith.constant 0 : index
    %c0_0 = arith.constant 0 : index
    %c0_1 = arith.constant 0 : index
    %0 = vector.load %arg2[%c0, %c0_0, %c0_1] : memref<1x16x128xf32, #tpu.memory_space<vmem>>, vector<1x16x128xf32>
    %1 = vector.shape_cast %0 : vector<1x16x128xf32> to vector<16x128xf32>
    %2 = arith.truncf %1 : vector<16x128xf32> to vector<16x128xbf16>
    %c0_2 = arith.constant 0 : index
    %c0_3 = arith.constant 0 : index
    %3 = vector.load %arg3[%c0_2, %c0_3] : memref<160x128xf32, #tpu.memory_space<vmem>>, vector<16x16xf32>
    %4 = arith.truncf %3 : vector<16x16xf32> to vector<16x16xbf16>
    %cst = arith.constant dense<0.000000e+00> : vector<16x128xf32>
    %5 = tpu.matmul %4, %2, %cst {dimension_numbers = #tpu.dot_dimension_numbers<[1], [0], [0], [1], [0, 0, 1, 1], [], []>} : vector<16x16xbf16>, vector<16x128xbf16>, vector<16x128xf32> -> vector<16x128xf32>
    %c16 = arith.constant 16 : index
    %c0_4 = arith.constant 0 : index
    %6 = vector.load %arg3[%c16, %c0_4] : memref<160x128xf32, #tpu.memory_space<vmem>>, vector<16x1xf32>
    %7 = vector.broadcast %6 : vector<16x1xf32> to vector<16x128xf32>
    %8 = arith.addf %5, %7 : vector<16x128xf32>
    %cst_5 = arith.constant 0.000000e+00 : f32
    %9 = vector.broadcast %cst_5 : f32 to vector<16x128xf32>
    %10 = arith.maximumf %8, %9 : vector<16x128xf32>
    %c32 = arith.constant 32 : index
    %c0_6 = arith.constant 0 : index
    %11 = vector.load %arg3[%c32, %c0_6] : memref<160x128xf32, #tpu.memory_space<vmem>>, vector<8x16xf32>
    %12 = arith.truncf %11 : vector<8x16xf32> to vector<8x16xbf16>
    %13 = arith.truncf %10 : vector<16x128xf32> to vector<16x128xbf16>
    %cst_7 = arith.constant dense<0.000000e+00> : vector<8x128xf32>
    %14 = tpu.matmul %12, %13, %cst_7 {dimension_numbers = #tpu.dot_dimension_numbers<[1], [0], [0], [1], [0, 0, 1, 1], [], []>} : vector<8x16xbf16>, vector<16x128xbf16>, vector<8x128xf32> -> vector<8x128xf32>
    %c40 = arith.constant 40 : index
    %c0_8 = arith.constant 0 : index
    %15 = vector.load %arg3[%c40, %c0_8] : memref<160x128xf32, #tpu.memory_space<vmem>>, vector<8x1xf32>
    %16 = vector.broadcast %15 : vector<8x1xf32> to vector<8x128xf32>
    %17 = arith.addf %14, %16 : vector<8x128xf32>
    %cst_9 = arith.constant dense<0.000000e+00> : vector<128xf32>
    %18 = vector.multi_reduction <add>, %17, %cst_9 [0] : vector<8x128xf32> to vector<128xf32>
    %19 = vector.shape_cast %18 : vector<128xf32> to vector<1x128xf32>
    %cst_10 = arith.constant 8.000000e+00 : f32
    %20 = vector.broadcast %cst_10 : f32 to vector<1x128xf32>
    %21 = arith.divf %19, %20 : vector<1x128xf32>
    %22 = arith.mulf %17, %17 : vector<8x128xf32>
    %cst_11 = arith.constant dense<0.000000e+00> : vector<128xf32>
    %23 = vector.multi_reduction <add>, %22, %cst_11 [0] : vector<8x128xf32> to vector<128xf32>
    %24 = vector.shape_cast %23 : vector<128xf32> to vector<1x128xf32>
    %cst_12 = arith.constant 8.000000e+00 : f32
    %25 = vector.broadcast %cst_12 : f32 to vector<1x128xf32>
    %26 = arith.divf %24, %25 : vector<1x128xf32>
    %27 = arith.mulf %21, %21 : vector<1x128xf32>
    %28 = arith.subf %26, %27 : vector<1x128xf32>
    %cst_13 = arith.constant 0.000000e+00 : f32
    %29 = vector.broadcast %cst_13 : f32 to vector<1x128xf32>
    %30 = arith.maximumf %28, %29 : vector<1x128xf32>
    %31 = vector.broadcast %21 : vector<1x128xf32> to vector<8x128xf32>
    %32 = arith.subf %17, %31 : vector<8x128xf32>
    %cst_14 = arith.constant 9.99999974E-6 : f32
    %33 = vector.broadcast %cst_14 : f32 to vector<1x128xf32>
    %34 = arith.addf %30, %33 : vector<1x128xf32>
    %35 = math.rsqrt %34 : vector<1x128xf32>
    %36 = vector.broadcast %35 : vector<1x128xf32> to vector<8x128xf32>
    %37 = arith.mulf %32, %36 : vector<8x128xf32>
    %c48 = arith.constant 48 : index
    %c0_15 = arith.constant 0 : index
    %38 = vector.load %arg3[%c48, %c0_15] : memref<160x128xf32, #tpu.memory_space<vmem>>, vector<8x1xf32>
    %39 = vector.broadcast %38 : vector<8x1xf32> to vector<8x128xf32>
    %40 = arith.mulf %37, %39 : vector<8x128xf32>
    %c56 = arith.constant 56 : index
    %c0_16 = arith.constant 0 : index
    %41 = vector.load %arg3[%c56, %c0_16] : memref<160x128xf32, #tpu.memory_space<vmem>>, vector<8x1xf32>
    %42 = vector.broadcast %41 : vector<8x1xf32> to vector<8x128xf32>
    %43 = arith.addf %40, %42 : vector<8x128xf32>
    %c96 = arith.constant 96 : index
    %c0_17 = arith.constant 0 : index
    %44 = vector.load %arg3[%c96, %c0_17] : memref<160x128xf32, #tpu.memory_space<vmem>>, vector<32x8xf32>
    %45 = arith.truncf %44 : vector<32x8xf32> to vector<32x8xbf16>
    %46 = arith.truncf %43 : vector<8x128xf32> to vector<8x128xbf16>
    %cst_18 = arith.constant dense<0.000000e+00> : vector<32x128xf32>
    %47 = tpu.matmul %45, %46, %cst_18 {dimension_numbers = #tpu.dot_dimension_numbers<[1], [0], [0], [1], [0, 0, 1, 1], [], []>} : vector<32x8xbf16>, vector<8x128xbf16>, vector<32x128xf32> -> vector<32x128xf32>
    %c128 = arith.constant 128 : index
    %c0_19 = arith.constant 0 : index
    %48 = vector.load %arg3[%c128, %c0_19] : memref<160x128xf32, #tpu.memory_space<vmem>>, vector<32x1xf32>
    %49 = vector.broadcast %48 : vector<32x1xf32> to vector<32x128xf32>
    %50 = arith.addf %47, %49 : vector<32x128xf32>
    %cst_20 = arith.constant dense<0x7F800000> : vector<128xf32>
    %51 = vector.multi_reduction <minimumf>, %50, %cst_20 [0] : vector<32x128xf32> to vector<128xf32>
    %52 = vector.shape_cast %51 : vector<128xf32> to vector<1x128xf32>
    %53 = tpu.iota {dimensions = array<i32: 0>} : vector<32x128xi32>
    %54 = vector.broadcast %52 : vector<1x128xf32> to vector<32x128xf32>
    %55 = arith.cmpf oeq, %50, %54 : vector<32x128xf32>
    %c32_i32 = arith.constant 32 : i32
    %56 = vector.broadcast %c32_i32 : i32 to vector<32x128xi32>
    %57 = arith.select %55, %53, %56 : vector<32x128xi1>, vector<32x128xi32>
    %cst_21 = arith.constant dense<2147483647> : vector<128xi32>
    %58 = vector.multi_reduction <minsi>, %57, %cst_21 [0] : vector<32x128xi32> to vector<128xi32>
    %59 = vector.shape_cast %58 : vector<128xi32> to vector<1x128xi32>
    %60 = vector.broadcast %59 : vector<1x128xi32> to vector<32x128xi32>
    %61 = arith.cmpi eq, %53, %60 : vector<32x128xi32>
    %62 = arith.extui %61 : vector<32x128xi1> to vector<32x128xi32>
    %63 = arith.sitofp %62 : vector<32x128xi32> to vector<32x128xf32>
    %64 = arith.truncf %63 : vector<32x128xf32> to vector<32x128xbf16>
    %c64 = arith.constant 64 : index
    %c0_22 = arith.constant 0 : index
    %65 = vector.load %arg3[%c64, %c0_22] : memref<160x128xf32, #tpu.memory_space<vmem>>, vector<16x32xf32>
    %66 = arith.truncf %65 : vector<16x32xf32> to vector<16x32xbf16>
    %cst_23 = arith.constant dense<0.000000e+00> : vector<16x128xf32>
    %67 = tpu.matmul %66, %64, %cst_23 {dimension_numbers = #tpu.dot_dimension_numbers<[1], [0], [0], [1], [0, 0, 1, 1], [], []>} : vector<16x32xbf16>, vector<32x128xbf16>, vector<16x128xf32> -> vector<16x128xf32>
    %c80 = arith.constant 80 : index
    %c0_24 = arith.constant 0 : index
    %68 = vector.load %arg3[%c80, %c0_24] : memref<160x128xf32, #tpu.memory_space<vmem>>, vector<16x32xf32>
    %69 = arith.truncf %68 : vector<16x32xf32> to vector<16x32xbf16>
    %cst_25 = arith.constant dense<0.000000e+00> : vector<16x128xf32>
    %70 = tpu.matmul %69, %64, %cst_25 {dimension_numbers = #tpu.dot_dimension_numbers<[1], [0], [0], [1], [0, 0, 1, 1], [], []>} : vector<16x32xbf16>, vector<32x128xbf16>, vector<16x128xf32> -> vector<16x128xf32>
    %71 = arith.addf %67, %70 : vector<16x128xf32>
    %c0_26 = arith.constant 0 : index
    %c0_27 = arith.constant 0 : index
    %c0_28 = arith.constant 0 : index
    %72 = vector.load %arg4[%c0_26, %c0_27, %c0_28] : memref<1x16x128xf32, #tpu.memory_space<vmem>>, vector<1x16x128xf32>
    %73 = vector.shape_cast %72 : vector<1x16x128xf32> to vector<16x128xf32>
    %74 = vector.shape_cast %71 : vector<16x128xf32> to vector<1x16x128xf32>
    tpu.vector_store %arg4[%c0_26, %c0_27, %c0_28], %74 {strides = array<i32>} : memref<1x16x128xf32, #tpu.memory_space<vmem>>, vector<1x16x128xf32>,
    %c0_29 = arith.constant 0 : index
    %c0_30 = arith.constant 0 : index
    %c0_31 = arith.constant 0 : index
    %75 = vector.load %arg5[%c0_29, %c0_30, %c0_31] : memref<1x1x128xi32, #tpu.memory_space<vmem>>, vector<1x1x128xi32>
    %76 = vector.shape_cast %75 : vector<1x1x128xi32> to vector<1x128xi32>
    %77 = vector.shape_cast %59 : vector<1x128xi32> to vector<1x1x128xi32>
    tpu.vector_store %arg5[%c0_29, %c0_30, %c0_31], %77 {strides = array<i32>} : memref<1x1x128xi32, #tpu.memory_space<vmem>>, vector<1x1x128xi32>,
    return
  }
  func.func @transform_0(%arg0: i32, %arg1: i32) -> (i32, i32, i32) {
    %c0_i32 = arith.constant 0 : i32
    %c0_i32_0 = arith.constant 0 : i32
    return %arg0, %c0_i32, %arg1 : i32, i32, i32
  }
  func.func @transform_1(%arg0: i32, %arg1: i32) -> (i32, i32) {
    %c0_i32 = arith.constant 0 : i32
    %c0_i32_0 = arith.constant 0 : i32
    %c0_i32_1 = arith.constant 0 : i32
    return %c0_i32, %c0_i32_0 : i32, i32
  }
  func.func @transform_2(%arg0: i32, %arg1: i32) -> (i32, i32, i32) {
    %c0_i32 = arith.constant 0 : i32
    %c0_i32_0 = arith.constant 0 : i32
    return %arg0, %c0_i32, %arg1 : i32, i32, i32
  }
  func.func @transform_3(%arg0: i32, %arg1: i32) -> (i32, i32, i32) {
    %c0_i32 = arith.constant 0 : i32
    %c0_i32_0 = arith.constant 0 : i32
    return %arg0, %c0_i32, %arg1 : i32, i32, i32
  }
}

</mosaic_0001>

<llo_original>
// kernel: vector_quantizer_forward.1
$region0: #{vector_quantizer_forward.1}
  #allocation0 [shape = 'u32[]', space=smem, size = 0x4, offset = 0x4, fixed_abs, tag = 'smem constant byte address 0x4 - core index']
  #allocation1 [shape = 'u32[144,128]{1,0:T(1,128)}', space=vmem, size = 0x12000, scoped, tag = 'internal scratch']
  %s0 = inlined_call_operand.vmem [shape: f32[2,16,256], index: 0, kind: input, shape index: {}]
  %s1 = inlined_call_operand.vmem [shape: f32[160,128], index: 1, kind: input, shape index: {}]
  %s2 = inlined_call_operand.vmem [shape: f32[2,16,256], index: 2, kind: output, shape index: {0}]
  %s3 = inlined_call_operand.vmem [shape: s32[2,1,256], index: 3, kind: output, shape index: {1}]
  %4 = xla_tuple %s2, %s3
  %s5 = sld [smem:[#allocation0]]
  $region121: #{vector_quantizer_forward.1} parent=0
    _
  %s7 = ssub.s32 1, %s5
  %s8 = scalar_select 0, %s7, %s5
  $region1: #{vector_quantizer_forward.1} parent=0
    #allocation2 [shape = 'u8[16384]{0}', space=vmem, size = 0x4000, scoped, tag = 'input window, operand 0']
    #allocation3 [shape = 'u8[16384]{0}', space=vmem, size = 0x4000, scoped, tag = 'output window, operand 0']
    loop: start=0, step=1, limit=6
    $region2: #{vector_quantizer_forward.1} parent=1 // loop_pre_header
      _
    $region3: #{vector_quantizer_forward.1} parent=1 // loop_header
      %s10 = sphi 0, %s14
      %p11 = scmp.ge.s32.totalorder %s10, 6
      %s17 = sphi 0, %s29
      %s18 = sphi 0, %s25
      %s19 = sphi 0, %s17
      %s20 = sphi 0, %s18
      %s21 = sphi 0, %s19
      %s22 = sphi 0, %s20
      %s34 = sphi 0, %s36
      %s37 = sphi 0, %s34
      %s38 = sphi 0, %s37
      %s54 = sphi 0, %s38
      %s58 = sphi 0, %s58
      %s60 = sphi 0, %s58
      %s61 = sphi 0, %s60
      %s75 = sphi 0, %s61
      %s83 = sphi 0, %s85
      %s86 = sphi 0, %s83
      %s87 = sphi 0, %s86
      %s103 = sphi 0, %s87
      %s111 = sphi 0, %s113
      %s114 = sphi 0, %s111
      %s115 = sphi 0, %s114
      %s131 = sphi 0, %s115
    $region4: #{vector_quantizer_forward.1} parent=1 // loop_header_branch
      %13 = sbr.rel (%p11) target = $region8
    $region5: #{vector_quantizer_forward.1} parent=1 // loop_body
      %s15 = ssub.s32 %s10, 1
      %s16 = ssub.s32 %s10, 2
      %s23 = sadd.s32 1, %s18
      %p24 = scmp.ge.s32.totalorder %s23, 2
      %s25 = scalar_select %p24, 0, %s23
      %s26 = sadd.s32 1, %s17
      %s27 = scalar_select %p24, %s26, %s17
      %p28 = scmp.ge.s32.totalorder %s27, 2
      %s29 = scalar_select %p28, 0, %s27
      %s30 = ssub.s32 %s17, %s29
      %s31 = ssub.s32 %s18, %s25
      %s32 = sor.u32 %s30, %s31
      %p33 = scmp.eq.s32.totalorder %s32, 0
      %s35 = sadd.s32 %s34, 1
      %s36 = scalar_select %p33, %s34, %s35
      %p39 = pneg %p33
      %p40 = scmp.eq.s32.totalorder %s10, 3
      %p41 = por %p39, %p40
      %p42 = scmp.ne.s32.totalorder %s34, %s37
      %p43 = scmp.eq.s32.totalorder %s10, 0
      %p44 = por %p42, %p43
      %p45 = scmp.ne.s32.totalorder %s34, %s37
      %p46 = scmp.eq.s32.totalorder %s15, 3
      %p47 = por %p45, %p46
      %p48 = scmp.ne.s32.totalorder %s37, %s38
      %p49 = scmp.eq.s32.totalorder %s15, 0
      %p50 = por %p48, %p49
      %p51 = scmp.ne.s32.totalorder %s37, %s38
      %p52 = scmp.eq.s32.totalorder %s16, 3
      %p53 = por %p51, %p52
      %p55 = scmp.ne.s32.totalorder %s38, %s54
      %p56 = scmp.eq.s32.totalorder %s16, 0
      %p57 = por %p55, %p56
      %s59 = sadd.s32 %s58, 1
      %p62 = scmp.eq.s32.totalorder %s10, 3
      %p63 = scmp.ne.s32.totalorder %s58, %s60
      %p64 = scmp.eq.s32.totalorder %s10, 0
      %p65 = por %p63, %p64
      %p66 = scmp.ne.s32.totalorder %s58, %s60
      %p67 = scmp.eq.s32.totalorder %s15, 3
      %p68 = por %p66, %p67
      %p69 = scmp.ne.s32.totalorder %s60, %s61
      %p70 = scmp.eq.s32.totalorder %s15, 0
      %p71 = por %p69, %p70
      %p72 = scmp.ne.s32.totalorder %s60, %s61
      %p73 = scmp.eq.s32.totalorder %s16, 3
      %p74 = por %p72, %p73
      %p76 = scmp.ne.s32.totalorder %s61, %s75
      %p77 = scmp.eq.s32.totalorder %s16, 0
      %p78 = por %p76, %p77
      %s79 = ssub.s32 %s17, %s29
      %s80 = ssub.s32 %s18, %s25
      %s81 = sor.u32 %s79, %s80
      %p82 = scmp.eq.s32.totalorder %s81, 0
      %s84 = sadd.s32 %s83, 1
      %s85 = scalar_select %p82, %s83, %s84
      %p88 = pneg %p82
      %p89 = scmp.eq.s32.totalorder %s10, 3
      %p90 = por %p88, %p89
      %p91 = scmp.ne.s32.totalorder %s83, %s86
      %p92 = scmp.eq.s32.totalorder %s10, 0
      %p93 = por %p91, %p92
      %p94 = scmp.ne.s32.totalorder %s83, %s86
      %p95 = scmp.eq.s32.totalorder %s15, 3
      %p96 = por %p94, %p95
      %p97 = scmp.ne.s32.totalorder %s86, %s87
      %p98 = scmp.eq.s32.totalorder %s15, 0
      %p99 = por %p97, %p98
      %p100 = scmp.ne.s32.totalorder %s86, %s87
      %p101 = scmp.eq.s32.totalorder %s16, 3
      %p102 = por %p100, %p101
      %p104 = scmp.ne.s32.totalorder %s87, %s103
      %p105 = scmp.eq.s32.totalorder %s16, 0
      %p106 = por %p104, %p105
      %s107 = ssub.s32 %s17, %s29
      %s108 = ssub.s32 %s18, %s25
      %s109 = sor.u32 %s107, %s108
      %p110 = scmp.eq.s32.totalorder %s109, 0
      %s112 = sadd.s32 %s111, 1
      %s113 = scalar_select %p110, %s111, %s112
      %p116 = pneg %p110
      %p117 = scmp.eq.s32.totalorder %s10, 3
      %p118 = por %p116, %p117
      %p119 = scmp.ne.s32.totalorder %s111, %s114
      %p120 = scmp.eq.s32.totalorder %s10, 0
      %p121 = por %p119, %p120
      %p122 = scmp.ne.s32.totalorder %s111, %s114
      %p123 = scmp.eq.s32.totalorder %s15, 3
      %p124 = por %p122, %p123
      %p125 = scmp.ne.s32.totalorder %s114, %s115
      %p126 = scmp.eq.s32.totalorder %s15, 0
      %p127 = por %p125, %p126
      %p128 = scmp.ne.s32.totalorder %s114, %s115
      %p129 = scmp.eq.s32.totalorder %s16, 3
      %p130 = por %p128, %p129
      %p132 = scmp.ne.s32.totalorder %s115, %s131
      %p133 = scmp.eq.s32.totalorder %s16, 0
      %p134 = por %p132, %p133
      %p135 = scmp.le.s32.totalorder 1, %s10
      %p136 = scmp.lt.s32.totalorder %s10, 5
      %p137 = pnand %p135, %p136
      %p138 = pneg %p137
      // Predicated region
      $region9: #{vector_quantizer_forward.1} parent=5 // pred_check
        _
      $region10: #{vector_quantizer_forward.1} parent=5 // pred_check_branch
        %140 = sbr.rel (%p137) target = $region12
      $region11: #{vector_quantizer_forward.1} parent=5 // pred_region
        %s141 = ssub.s32 %s10, 1
        // Predicated region
        $region13: #{vector_quantizer_forward.1} parent=11 // pred_check
          %p142 = pneg %p71
        $region14: #{vector_quantizer_forward.1} parent=11 // pred_check_branch
          %144 = sbr.rel (%p142) target = $region16
        $region15: #{vector_quantizer_forward.1} parent=11 // pred_region
          _
        $region16: #{vector_quantizer_forward.1} parent=11 // pred_fallthru
          _
      $region12: #{vector_quantizer_forward.1} parent=5 // pred_fallthru
        _
      %p145 = scmp.lt.s32.totalorder %s10, 4
      // Predicated region
      $region17: #{vector_quantizer_forward.1} parent=5 // pred_check
        %p146 = pneg %p145
      $region18: #{vector_quantizer_forward.1} parent=5 // pred_check_branch
        %148 = sbr.rel (%p146) target = $region20
      $region19: #{vector_quantizer_forward.1} parent=5 // pred_region
        // Predicated region
        $region21: #{vector_quantizer_forward.1} parent=19 // pred_check
          %p149 = pneg %p44
        $region22: #{vector_quantizer_forward.1} parent=19 // pred_check_branch
          %151 = sbr.rel (%p149) target = $region24
        $region23: #{vector_quantizer_forward.1} parent=19 // pred_region
          %s152 = sand.u32 %s34, 1
          %s153 = sand.u32 %s34, 1
          %s154 = smul.addr %s153, 16
          %s155 = scalar_lea.vmem [#allocation2], %s154
          %s156 = smul.addr %s17, 4
          %s157 = sadd.s32 %s18, %s156
          %s158 = smul.addr %s157, 8
          %s159 = scalar_lea.vmem %s0, %s158
          // Predicated region
          $region25: #{vector_quantizer_forward.1} parent=23 // pred_check
            _
          $region26: #{vector_quantizer_forward.1} parent=23 // pred_check_branch
            %161 = sbr.rel (0) target = $region28
          $region27: #{vector_quantizer_forward.1} parent=23 // pred_region
            // Predicated region
            $region29: #{vector_quantizer_forward.1} parent=27 // pred_check
              _
            $region30: #{vector_quantizer_forward.1} parent=27 // pred_check_branch
              %163 = sbr.rel (0) target = $region32
            $region31: #{vector_quantizer_forward.1} parent=27 // pred_region
              // Predicated region
              $region44: #{vector_quantizer_forward.1} parent=31 // pred_check
                _
              $region45: #{vector_quantizer_forward.1} parent=31 // pred_check_branch
                %180 = sbr.rel (0) target = $region47
              $region46: #{vector_quantizer_forward.1} parent=31 // pred_region
                loop: start=0, step=1, limit=1
                $region48: #{vector_quantizer_forward.1} parent=46 // loop_pre_header
                  _
                $region49: #{vector_quantizer_forward.1} parent=46 // loop_header
                  %s182 = sphi 0, %s186
                  %p183 = scmp.ge.s32.totalorder %s182, 1
                  %s187 = sphi %s159, %s159
                  %s188 = sphi %s155, %s155
                $region50: #{vector_quantizer_forward.1} parent=46 // loop_header_branch
                  %185 = sbr.rel (%p183) target = $region54
                $region51: #{vector_quantizer_forward.1} parent=46 // loop_body
                  %v189 = vld [vmem:[%s187] sm:$0xff]
                  %190 = vst [vmem:[%s188] sm:$0xff] %v189
                  %v191 = vld [vmem:[%s187 + $0x10] sm:$0xff]
                  %192 = vst [vmem:[%s188 + $0x8] sm:$0xff] %v191
                $region52: #{vector_quantizer_forward.1} parent=46 // loop_footer
                  %s186 = sadd.s32 1, %s182
                $region53: #{vector_quantizer_forward.1} parent=46 // loop_footer_branch
                  %181 = sbr.rel target = $region49
                $region54: #{vector_quantizer_forward.1} parent=46 // loop_exit
                  _
              $region47: #{vector_quantizer_forward.1} parent=31 // pred_fallthru
                _
              // Predicated region
              $region55: #{vector_quantizer_forward.1} parent=31 // pred_check
                _
              $region56: #{vector_quantizer_forward.1} parent=31 // pred_check_branch
                %194 = sbr.rel target = $region58
              $region57: #{vector_quantizer_forward.1} parent=31 // pred_region
                _
              $region58: #{vector_quantizer_forward.1} parent=31 // pred_fallthru
                _
            $region32: #{vector_quantizer_forward.1} parent=27 // pred_fallthru
              _
            // Predicated region
            $region33: #{vector_quantizer_forward.1} parent=27 // pred_check
              _
            $region34: #{vector_quantizer_forward.1} parent=27 // pred_check_branch
              %165 = sbr.rel target = $region36
            $region35: #{vector_quantizer_forward.1} parent=27 // pred_region
              loop: start=0, step=1, limit=1
              $region37: #{vector_quantizer_forward.1} parent=35 // loop_pre_header
                _
              $region38: #{vector_quantizer_forward.1} parent=35 // loop_header
                %s168 = sphi 0, %s172
                %p169 = scmp.ge.s32.totalorder %s168, 1
                %s173 = sphi %s159, %s159
                %s174 = sphi %s155, %s155
              $region39: #{vector_quantizer_forward.1} parent=35 // loop_header_branch
                %171 = sbr.rel (%p169) target = $region43
              $region40: #{vector_quantizer_forward.1} parent=35 // loop_body
                %v175 = vld [vmem:[%s173] sm:$0xff]
                %176 = vst [vmem:[%s174] sm:$0xff] %v175
                %v177 = vld [vmem:[%s173 + $0x10] sm:$0xff]
                %178 = vst [vmem:[%s174 + $0x8] sm:$0xff] %v177
              $region41: #{vector_quantizer_forward.1} parent=35 // loop_footer
                %s172 = sadd.s32 1, %s168
              $region42: #{vector_quantizer_forward.1} parent=35 // loop_footer_branch
                %167 = sbr.rel target = $region38
              $region43: #{vector_quantizer_forward.1} parent=35 // loop_exit
                _
            $region36: #{vector_quantizer_forward.1} parent=27 // pred_fallthru
              _
          $region28: #{vector_quantizer_forward.1} parent=23 // pred_fallthru
            _
          %195 = vnop
        $region24: #{vector_quantizer_forward.1} parent=19 // pred_fallthru
          _
      $region20: #{vector_quantizer_forward.1} parent=5 // pred_fallthru
        _
      %p196 = scmp.le.s32.totalorder 1, %s10
      %p197 = scmp.lt.s32.totalorder %s10, 5
      %p198 = pnand %p196, %p197
      %p199 = pneg %p198
      // Predicated region
      $region59: #{vector_quantizer_forward.1} parent=5 // pred_check
        _
      $region60: #{vector_quantizer_forward.1} parent=5 // pred_check_branch
        %201 = sbr.rel (%p198) target = $region62
      $region61: #{vector_quantizer_forward.1} parent=5 // pred_region
        %s202 = ssub.s32 %s10, 1
        %s203 = sand.u32 %s37, 1
        %s204 = sand.u32 %s37, 1
        %s205 = smul.addr %s204, 16
        %s206 = scalar_lea.vmem [#allocation2], %s205
        // Predicated region
        $region63: #{vector_quantizer_forward.1} parent=61 // pred_check
          %p207 = pneg %p50
        $region64: #{vector_quantizer_forward.1} parent=61 // pred_check_branch
          %209 = sbr.rel (%p207) target = $region66
        $region65: #{vector_quantizer_forward.1} parent=61 // pred_region
          _
        $region66: #{vector_quantizer_forward.1} parent=61 // pred_fallthru
          _
        %s210 = sand.u32 %s37, 1
        %s211 = sand.u32 %s37, 1
        %s212 = smul.addr %s211, 16
        %s213 = scalar_lea.vmem [#allocation2], %s212
        %p214 = pneg %p50
        %p215 = pneg %p47
        %p216 = pneg %p71
        %p217 = pneg %p68
        %p218 = pneg %p99
        %p219 = pneg %p96
        %s220 = sand.u32 %s86, 1
        %s221 = sand.u32 %s86, 1
        %s222 = smul.addr %s221, 16
        %s223 = scalar_lea.vmem [#allocation3], %s222
        %p224 = pneg %p127
        %p225 = pneg %p124
        %p226 = scmp.lt.s32.totalorder %s19, 1
        %s227 = scalar_select %p226, %s19, 1
        %p228 = scmp.lt.s32.totalorder %s20, 1
        %s229 = scalar_select %p228, %s20, 1
        %s230 = smul.addr %s227, 2
        %s231 = sadd.s32 %s229, %s230
        %s232 = scalar_lea.vmem %s3, %s231
        %p233 = scmp.lt.s32.totalorder %s19, 1
        %s234 = scalar_select %p233, %s19, 1
        %p235 = scmp.lt.s32.totalorder %s20, 1
        %s236 = scalar_select %p235, %s20, 1
        %s237 = smul.addr %s234, 2
        %s238 = sadd.s32 %s236, %s237
        %s239 = scalar_lea.vmem %s3, %s238
        %v241 = vld [vmem:[%s206] sm:$0xff]
        %v242 = vld [vmem:[%s206 + $0x8] sm:$0xff]
        %v243 = vpack.c.bf16 %v242, %v241
        %v244 = vld [vmem:[%s1] sm:$0xff]
        %v245 = vld [vmem:[%s1 + $0x8] sm:$0xff]
        %v246 = vpack.c.bf16 %v245, %v244
        %v247 = vld [vmem:[%s1 + $0x10] sm:$0xff]
        %v248 = vld [vmem:[%s1 + $0x18] sm:$0xff]
        %250 = vset.pattern.permute.xlu0 0
        %251 = vperm.xlu0 %250, %v247
        %v252 = vpop.permute.xlu0 %251
        %255 = vset.pattern.permute.xlu0 0
        %256 = vperm.xlu0 %255, %v248
        %v257 = vpop.permute.xlu0 %256
        %vm259 = vcmask 130048
        %v261 = vsel %vm259, %v246, 0
        %263 = vmatprep.subr.bf16.mxu0 0
        %264 = vmatpush1.bf16.msra.mxu0 %v243
        %265 = vmatprep.subr.bf16.mxu0 0
        %266 = vmatpush1.bf16.msra.mxu0 0
        %267 = vmatprep.subr.bf16.mxu0 0
        %268 = vmatpush1.bf16.msra.mxu0 0
        %269 = vmatprep.subr.bf16.mxu0 0
        %270 = vmatpush1.bf16.msra.mxu0 0
        %271 = vmatprep.subr.bf16.mxu0 0
        %272 = vmatpush1.bf16.msra.mxu0 0
        %273 = vmatprep.subr.bf16.mxu0 0
        %274 = vmatpush1.bf16.msra.mxu0 0
        %275 = vmatprep.subr.bf16.mxu0 0
        %276 = vmatpush1.bf16.msra.mxu0 0
        %277 = vmatprep.subr.bf16.mxu0 0
        %278 = vmatpush1.bf16.msra.mxu0 0
        %279 = vmatprep.subr.bf16.mxu0 0
        %280 = vmatpush1.bf16.msra.mxu0 0
        %281 = vmatprep.subr.bf16.mxu0 0
        %282 = vmatpush1.bf16.msra.mxu0 0
        %283 = vmatprep.subr.bf16.mxu0 0
        %284 = vmatpush1.bf16.msra.mxu0 0
        %285 = vmatprep.subr.bf16.mxu0 0
        %286 = vmatpush1.bf16.msra.mxu0 0
        %287 = vmatprep.subr.bf16.mxu0 0
        %288 = vmatpush1.bf16.msra.mxu0 0
        %289 = vmatprep.subr.bf16.mxu0 0
        %290 = vmatpush1.bf16.msra.mxu0 0
        %291 = vmatprep.subr.bf16.mxu0 0
        %292 = vmatpush1.bf16.msra.mxu0 0
        %293 = vmatprep.subr.bf16.mxu0 0
        %294 = vmatpush1.bf16.msra.mxu0 0
        %295 = vmatprep.mubr.bf16.mxu0 0
        %296 = vmatmul.mubr.bf16.gmra.mrb[0].mxu0 %v261
        %v297 = vpop.f32.mrb[0].mxu0
        %v298 = vadd.f32 %v252, %v297
        %v299 = vpop.f32.mrb[0].mxu0
        %v300 = vpop.f32.mrb[0].mxu0
        %v301 = vadd.f32 %v257, %v300
        %v302 = vpop.f32.mrb[0].mxu0
        %303 = vdwg.mxu0
        %v304 = vmax.f32 %v298, 0.0
        %v305 = vmax.f32 %v301, 0.0
        %v306 = vld [vmem:[%s1 + $0x20] sm:$0xff]
        %v307 = vpack.c.bf16 %v306, %v306
        %v308 = vpack.c.bf16 %v305, %v304
        %v309 = vld [vmem:[%s1 + $0x28] sm:$0xff]
        %311 = vset.pattern.permute.xlu0 0
        %312 = vperm.xlu0 %311, %v309
        %v313 = vpop.permute.xlu0 %312
        %v316 = vsel %vm259, %v307, 0
        %318 = vmatprep.subr.bf16.mxu0 0
        %319 = vmatpush1.bf16.msra.mxu0 %v308
        %320 = vmatprep.subr.bf16.mxu0 0
        %321 = vmatpush1.bf16.msra.mxu0 0
        %322 = vmatprep.subr.bf16.mxu0 0
        %323 = vmatpush1.bf16.msra.mxu0 0
        %324 = vmatprep.subr.bf16.mxu0 0
        %325 = vmatpush1.bf16.msra.mxu0 0
        %326 = vmatprep.subr.bf16.mxu0 0
        %327 = vmatpush1.bf16.msra.mxu0 0
        %328 = vmatprep.subr.bf16.mxu0 0
        %329 = vmatpush1.bf16.msra.mxu0 0
        %330 = vmatprep.subr.bf16.mxu0 0
        %331 = vmatpush1.bf16.msra.mxu0 0
        %332 = vmatprep.subr.bf16.mxu0 0
        %333 = vmatpush1.bf16.msra.mxu0 0
        %334 = vmatprep.subr.bf16.mxu0 0
        %335 = vmatpush1.bf16.msra.mxu0 0
        %336 = vmatprep.subr.bf16.mxu0 0
        %337 = vmatpush1.bf16.msra.mxu0 0
        %338 = vmatprep.subr.bf16.mxu0 0
        %339 = vmatpush1.bf16.msra.mxu0 0
        %340 = vmatprep.subr.bf16.mxu0 0
        %341 = vmatpush1.bf16.msra.mxu0 0
        %342 = vmatprep.subr.bf16.mxu0 0
        %343 = vmatpush1.bf16.msra.mxu0 0
        %344 = vmatprep.subr.bf16.mxu0 0
        %345 = vmatpush1.bf16.msra.mxu0 0
        %346 = vmatprep.subr.bf16.mxu0 0
        %347 = vmatpush1.bf16.msra.mxu0 0
        %348 = vmatprep.subr.bf16.mxu0 0
        %349 = vmatpush1.bf16.msra.mxu0 0
        %350 = vmatprep.mubr.bf16.mxu0 0
        %351 = vmatmul.mubr.bf16.gmra.mrb[0].mxu0 %v316
        %v352 = vpop.f32.mrb[0].mxu0
        %v353 = vadd.f32 %v313, %v352
        %v354 = vpop.f32.mrb[0].mxu0
        %v355 = vpop.f32.mrb[0].mxu0
        %v356 = vpop.f32.mrb[0].mxu0
        %357 = vdwg.mxu0
        %v358 = vrot.slane %v353, 4
        %v359 = vadd.f32 %v353, %v358
        %v360 = vrot.slane %v359, 2
        %v361 = vadd.f32 %v359, %v360
        %v362 = vrot.slane %v361, 1
        %v363 = vadd.f32 %v361, %v362
        %v364 = vrcp.pop 8.0
        %v365 = vmul.f32 %v363, %v364
        %v366 = vmul.f32 %v353, %v353
        %v367 = vrot.slane %v366, 4
        %v368 = vadd.f32 %v366, %v367
        %v369 = vrot.slane %v368, 2
        %v370 = vadd.f32 %v368, %v369
        %v371 = vrot.slane %v370, 1
        %v372 = vadd.f32 %v370, %v371
        %v373 = vmul.f32 %v372, %v364
        %v374 = vmul.f32 %v365, %v365
        %v375 = vsub.f32 %v373, %v374
        %v376 = vmax.f32 %v375, 0.0
        %v377 = vsub.f32 %v353, %v365
        %v378 = vadd.f32 %v376, 1e-05
        %v379 = vrsqrt.pop %v378
        %v380 = vmul.f32 %v377, %v379
        %v381 = vld [vmem:[%s1 + $0x30] sm:$0xff]
        %383 = vset.pattern.permute.xlu0 0
        %384 = vperm.xlu0 %383, %v381
        %v385 = vpop.permute.xlu0 %384
        %v387 = vmul.f32 %v380, %v385
        %v388 = vld [vmem:[%s1 + $0x38] sm:$0xff]
        %390 = vset.pattern.permute.xlu0 0
        %391 = vperm.xlu0 %390, %v388
        %v392 = vpop.permute.xlu0 %391
        %v394 = vadd.f32 %v387, %v392
        %v395 = vld [vmem:[%s1 + $0x60] sm:$0xff]
        %v396 = vld [vmem:[%s1 + $0x68] sm:$0xff]
        %v397 = vld [vmem:[%s1 + $0x70] sm:$0xff]
        %v398 = vld [vmem:[%s1 + $0x78] sm:$0xff]
        %v399 = vpack.c.bf16 %v396, %v395
        %v400 = vpack.c.bf16 %v398, %v397
        %v401 = vpack.c.bf16 %v394, %v394
        %v402 = vld [vmem:[%s1 + $0x80] sm:$0xff]
        %v403 = vld [vmem:[%s1 + $0x88] sm:$0xff]
        %v404 = vld [vmem:[%s1 + $0x90] sm:$0xff]
        %v405 = vld [vmem:[%s1 + $0x98] sm:$0xff]
        %407 = vset.pattern.permute.xlu0 0
        %408 = vperm.xlu0 %407, %v402
        %v409 = vpop.permute.xlu0 %408
        %412 = vset.pattern.permute.xlu0 0
        %413 = vperm.xlu0 %412, %v403
        %v414 = vpop.permute.xlu0 %413
        %417 = vset.pattern.permute.xlu0 0
        %418 = vperm.xlu0 %417, %v404
        %v419 = vpop.permute.xlu0 %418
        %422 = vset.pattern.permute.xlu0 0
        %423 = vperm.xlu0 %422, %v405
        %v424 = vpop.permute.xlu0 %423
        %vm426 = vcmask 64512
        %v428 = vsel %vm426, %v399, 0
        %v431 = vsel %vm426, %v400, 0
        %vm433 = vcmask 1043456
        %v435 = vsel %vm433, %v401, 0
        %437 = vmatprep.subr.bf16.mxu0 0
        %438 = vmatpush1.bf16.msra.mxu0 %v435
        %439 = vmatprep.subr.bf16.mxu0 0
        %440 = vmatpush1.bf16.msra.mxu0 0
        %441 = vmatprep.subr.bf16.mxu0 0
        %442 = vmatpush1.bf16.msra.mxu0 0
        %443 = vmatprep.subr.bf16.mxu0 0
        %444 = vmatpush1.bf16.msra.mxu0 0
        %445 = vmatprep.subr.bf16.mxu0 0
        %446 = vmatpush1.bf16.msra.mxu0 0
        %447 = vmatprep.subr.bf16.mxu0 0
        %448 = vmatpush1.bf16.msra.mxu0 0
        %449 = vmatprep.subr.bf16.mxu0 0
        %450 = vmatpush1.bf16.msra.mxu0 0
        %451 = vmatprep.subr.bf16.mxu0 0
        %452 = vmatpush1.bf16.msra.mxu0 0
        %453 = vmatprep.subr.bf16.mxu0 0
        %454 = vmatpush1.bf16.msra.mxu0 0
        %455 = vmatprep.subr.bf16.mxu0 0
        %456 = vmatpush1.bf16.msra.mxu0 0
        %457 = vmatprep.subr.bf16.mxu0 0
        %458 = vmatpush1.bf16.msra.mxu0 0
        %459 = vmatprep.subr.bf16.mxu0 0
        %460 = vmatpush1.bf16.msra.mxu0 0
        %461 = vmatprep.subr.bf16.mxu0 0
        %462 = vmatpush1.bf16.msra.mxu0 0
        %463 = vmatprep.subr.bf16.mxu0 0
        %464 = vmatpush1.bf16.msra.mxu0 0
        %465 = vmatprep.subr.bf16.mxu0 0
        %466 = vmatpush1.bf16.msra.mxu0 0
        %467 = vmatprep.subr.bf16.mxu0 0
        %468 = vmatpush1.bf16.msra.mxu0 0
        %469 = vmatprep.mubr.bf16.mxu0 0
        %470 = vmatmul.mubr.bf16.gmra.mrb[0].mxu0 %v428
        %v471 = vpop.f32.mrb[0].mxu0
        %v472 = vadd.f32 %v409, %v471
        %v473 = vpop.f32.mrb[0].mxu0
        %v474 = vpop.f32.mrb[0].mxu0
        %v475 = vadd.f32 %v414, %v474
        %v476 = vpop.f32.mrb[0].mxu0
        %477 = vmatprep.mubr.bf16.mxu0 0
        %478 = vmatmul.mubr.bf16.gmra.mrb[0].mxu0 %v431
        %v479 = vpop.f32.mrb[0].mxu0
        %v480 = vadd.f32 %v419, %v479
        %v481 = vpop.f32.mrb[0].mxu0
        %v482 = vpop.f32.mrb[0].mxu0
        %v483 = vadd.f32 %v424, %v482
        %v484 = vpop.f32.mrb[0].mxu0
        %485 = vdwg.mxu0
        %v486 = vmin.f32 %v472, %v475
        %v487 = vmin.f32 %v480, %v483
        %v488 = vmin.f32 %v486, %v487
        %v489 = vrot.slane %v488, 4
        %v490 = vmin.f32 %v488, %v489
        %v491 = vrot.slane %v490, 2
        %v492 = vmin.f32 %v490, %v491
        %v493 = vrot.slane %v492, 1
        %v494 = vmin.f32 %v492, %v493
        %v495 = vlaneseq
        %v496 = vshrl.u32 %v495, 7
        %v497 = vadd.s32 %v496, 8
        %v498 = vadd.s32 %v496, 16
        %v499 = vadd.s32 %v496, 24
        %vm500 = vcmp.eq.f32.partialorder %v472, %v494
        %vm501 = vcmp.eq.f32.partialorder %v475, %v494
        %vm502 = vcmp.eq.f32.partialorder %v480, %v494
        %vm503 = vcmp.eq.f32.partialorder %v483, %v494
        %v504 = vsel %vm500, %v496, 32
        %v505 = vsel %vm501, %v497, 32
        %v506 = vsel %vm502, %v498, 32
        %v507 = vsel %vm503, %v499, 32
        %vm508 = vcmp.lt.s32.totalorder %v504, %v505
        %v509 = vsel %vm508, %v504, %v505
        %vm510 = vcmp.lt.s32.totalorder %v506, %v507
        %v511 = vsel %vm510, %v506, %v507
        %vm512 = vcmp.lt.s32.totalorder %v509, %v511
        %v513 = vsel %vm512, %v509, %v511
        %v514 = vrot.slane %v513, 4
        %vm515 = vcmp.lt.s32.totalorder %v513, %v514
        %v516 = vsel %vm515, %v513, %v514
        %v517 = vrot.slane %v516, 2
        %vm518 = vcmp.lt.s32.totalorder %v516, %v517
        %v519 = vsel %vm518, %v516, %v517
        %v520 = vrot.slane %v519, 1
        %vm521 = vcmp.lt.s32.totalorder %v519, %v520
        %v522 = vsel %vm521, %v519, %v520
        %vm523 = vcmp.eq.s32.totalorder %v496, %v522
        %vm524 = vcmp.eq.s32.totalorder %v497, %v522
        %vm525 = vcmp.eq.s32.totalorder %v498, %v522
        %vm526 = vcmp.eq.s32.totalorder %v499, %v522
        %v527 = vsel %vm523, 1, 0
        %v528 = vsel %vm524, 1, 0
        %v529 = vsel %vm525, 1, 0
        %v530 = vsel %vm526, 1, 0
        %v531 = vcvt.s32.f32 %v527
        %v532 = vcvt.s32.f32 %v528
        %v533 = vcvt.s32.f32 %v529
        %v534 = vcvt.s32.f32 %v530
        %v535 = vpack.c.bf16 %v532, %v531
        %v536 = vpack.c.bf16 %v534, %v533
        %v537 = vld [vmem:[%s1 + $0x40] sm:$0xff]
        %v538 = vld [vmem:[%s1 + $0x48] sm:$0xff]
        %v539 = vpack.c.bf16 %v538, %v537
        %v540 = vld [vmem:[%s1 + $0x50] sm:$0xff]
        %v541 = vld [vmem:[%s1 + $0x58] sm:$0xff]
        %v542 = vpack.c.bf16 %v541, %v540
        %vm543 = vcmask 261120
        %v545 = vsel %vm543, %v542, 0
        %547 = vmatprep.subr.bf16.mxu0 0
        %548 = vmatpush1.bf16.msra.mxu0 %v535
        %549 = vmatprep.subr.bf16.mxu0 0
        %550 = vmatpush1.bf16.msra.mxu0 %v536
        %551 = vmatprep.subr.bf16.mxu0 0
        %552 = vmatpush1.bf16.msra.mxu0 0
        %553 = vmatprep.subr.bf16.mxu0 0
        %554 = vmatpush1.bf16.msra.mxu0 0
        %555 = vmatprep.subr.bf16.mxu0 0
        %556 = vmatpush1.bf16.msra.mxu0 0
        %557 = vmatprep.subr.bf16.mxu0 0
        %558 = vmatpush1.bf16.msra.mxu0 0
        %559 = vmatprep.subr.bf16.mxu0 0
        %560 = vmatpush1.bf16.msra.mxu0 0
        %561 = vmatprep.subr.bf16.mxu0 0
        %562 = vmatpush1.bf16.msra.mxu0 0
        %563 = vmatprep.subr.bf16.mxu0 0
        %564 = vmatpush1.bf16.msra.mxu0 0
        %565 = vmatprep.subr.bf16.mxu0 0
        %566 = vmatpush1.bf16.msra.mxu0 0
        %567 = vmatprep.subr.bf16.mxu0 0
        %568 = vmatpush1.bf16.msra.mxu0 0
        %569 = vmatprep.subr.bf16.mxu0 0
        %570 = vmatpush1.bf16.msra.mxu0 0
        %571 = vmatprep.subr.bf16.mxu0 0
        %572 = vmatpush1.bf16.msra.mxu0 0
        %573 = vmatprep.subr.bf16.mxu0 0
        %574 = vmatpush1.bf16.msra.mxu0 0
        %575 = vmatprep.subr.bf16.mxu0 0
        %576 = vmatpush1.bf16.msra.mxu0 0
        %577 = vmatprep.subr.bf16.mxu0 0
        %578 = vmatpush1.bf16.msra.mxu0 0
        %579 = vmatprep.mubr.bf16.mxu0 0
        %580 = vmatmul.mubr.bf16.gmra.mrb[0].mxu0 %v545
        %v581 = vpop.f32.mrb[0].mxu0
        %v582 = vadd.f32 0.0, %v581
        %v583 = vpop.f32.mrb[0].mxu0
        %v584 = vpop.f32.mrb[0].mxu0
        %v585 = vadd.f32 0.0, %v584
        %v586 = vpop.f32.mrb[0].mxu0
        %587 = vdwg.mxu0
        %v589 = vsel %vm543, %v539, 0
        %591 = vmatprep.subr.bf16.mxu0 0
        %592 = vmatpush1.bf16.msra.mxu0 %v535
        %593 = vmatprep.subr.bf16.mxu0 0
        %594 = vmatpush1.bf16.msra.mxu0 %v536
        %595 = vmatprep.subr.bf16.mxu0 0
        %596 = vmatpush1.bf16.msra.mxu0 0
        %597 = vmatprep.subr.bf16.mxu0 0
        %598 = vmatpush1.bf16.msra.mxu0 0
        %599 = vmatprep.subr.bf16.mxu0 0
        %600 = vmatpush1.bf16.msra.mxu0 0
        %601 = vmatprep.subr.bf16.mxu0 0
        %602 = vmatpush1.bf16.msra.mxu0 0
        %603 = vmatprep.subr.bf16.mxu0 0
        %604 = vmatpush1.bf16.msra.mxu0 0
        %605 = vmatprep.subr.bf16.mxu0 0
        %606 = vmatpush1.bf16.msra.mxu0 0
        %607 = vmatprep.subr.bf16.mxu0 0
        %608 = vmatpush1.bf16.msra.mxu0 0
        %609 = vmatprep.subr.bf16.mxu0 0
        %610 = vmatpush1.bf16.msra.mxu0 0
        %611 = vmatprep.subr.bf16.mxu0 0
        %612 = vmatpush1.bf16.msra.mxu0 0
        %613 = vmatprep.subr.bf16.mxu0 0
        %614 = vmatpush1.bf16.msra.mxu0 0
        %615 = vmatprep.subr.bf16.mxu0 0
        %616 = vmatpush1.bf16.msra.mxu0 0
        %617 = vmatprep.subr.bf16.mxu0 0
        %618 = vmatpush1.bf16.msra.mxu0 0
        %619 = vmatprep.subr.bf16.mxu0 0
        %620 = vmatpush1.bf16.msra.mxu0 0
        %621 = vmatprep.subr.bf16.mxu0 0
        %622 = vmatpush1.bf16.msra.mxu0 0
        %623 = vmatprep.mubr.bf16.mxu0 0
        %624 = vmatmul.mubr.bf16.gmra.mrb[0].mxu0 %v589
        %v625 = vpop.f32.mrb[0].mxu0
        %v626 = vadd.f32 %v582, %v625
        %v627 = vpop.f32.mrb[0].mxu0
        %v628 = vpop.f32.mrb[0].mxu0
        %v629 = vadd.f32 %v585, %v628
        %v630 = vpop.f32.mrb[0].mxu0
        %631 = vdwg.mxu0
        %632 = vst [vmem:[%s223] sm:$0xff] %v626
        %633 = vst [vmem:[%s223 + $0x8] sm:$0xff] %v629
        %634 = vst [vmem:[%s239] sm:$0x1] %v522
        %s635 = sand.u32 %s86, 1
        %s636 = sand.u32 %s86, 1
        %s637 = smul.addr %s636, 16
        %s638 = scalar_lea.vmem [#allocation3], %s637
        %p639 = scmp.lt.s32.totalorder %s19, 1
        %s640 = scalar_select %p639, %s19, 1
        %p641 = scmp.lt.s32.totalorder %s20, 1
        %s642 = scalar_select %p641, %s20, 1
        %s643 = smul.addr %s640, 2
        %s644 = sadd.s32 %s642, %s643
        %s645 = scalar_lea.vmem %s3, %s644
        // Predicated region
        $region67: #{vector_quantizer_forward.1} parent=61 // pred_check
          %p646 = pneg %p96
        $region68: #{vector_quantizer_forward.1} parent=61 // pred_check_branch
          %648 = sbr.rel (%p646) target = $region70
        $region69: #{vector_quantizer_forward.1} parent=61 // pred_region
          %s649 = smul.addr %s19, 4
          %s650 = sadd.s32 %s20, %s649
          %s651 = smul.addr %s650, 8
          %s652 = scalar_lea.vmem %s2, %s651
          // Predicated region
          $region71: #{vector_quantizer_forward.1} parent=69 // pred_check
            _
          $region72: #{vector_quantizer_forward.1} parent=69 // pred_check_branch
            %654 = sbr.rel (0) target = $region74
          $region73: #{vector_quantizer_forward.1} parent=69 // pred_region
            // Predicated region
            $region75: #{vector_quantizer_forward.1} parent=73 // pred_check
              _
            $region76: #{vector_quantizer_forward.1} parent=73 // pred_check_branch
              %656 = sbr.rel (0) target = $region78
            $region77: #{vector_quantizer_forward.1} parent=73 // pred_region
              // Predicated region
              $region90: #{vector_quantizer_forward.1} parent=77 // pred_check
                _
              $region91: #{vector_quantizer_forward.1} parent=77 // pred_check_branch
                %673 = sbr.rel (0) target = $region93
              $region92: #{vector_quantizer_forward.1} parent=77 // pred_region
                loop: start=0, step=1, limit=1
                $region94: #{vector_quantizer_forward.1} parent=92 // loop_pre_header
                  _
                $region95: #{vector_quantizer_forward.1} parent=92 // loop_header
                  %s675 = sphi 0, %s679
                  %p676 = scmp.ge.s32.totalorder %s675, 1
                  %s680 = sphi %s638, %s638
                  %s681 = sphi %s652, %s652
                $region96: #{vector_quantizer_forward.1} parent=92 // loop_header_branch
                  %678 = sbr.rel (%p676) target = $region100
                $region97: #{vector_quantizer_forward.1} parent=92 // loop_body
                  %v682 = vld [vmem:[%s680] sm:$0xff]
                  %683 = vst [vmem:[%s681] sm:$0xff] %v682
                  %v684 = vld [vmem:[%s680 + $0x8] sm:$0xff]
                  %685 = vst [vmem:[%s681 + $0x10] sm:$0xff] %v684
                $region98: #{vector_quantizer_forward.1} parent=92 // loop_footer
                  %s679 = sadd.s32 1, %s675
                $region99: #{vector_quantizer_forward.1} parent=92 // loop_footer_branch
                  %674 = sbr.rel target = $region95
                $region100: #{vector_quantizer_forward.1} parent=92 // loop_exit
                  _
              $region93: #{vector_quantizer_forward.1} parent=77 // pred_fallthru
                _
              // Predicated region
              $region101: #{vector_quantizer_forward.1} parent=77 // pred_check
                _
              $region102: #{vector_quantizer_forward.1} parent=77 // pred_check_branch
                %687 = sbr.rel target = $region104
              $region103: #{vector_quantizer_forward.1} parent=77 // pred_region
                _
              $region104: #{vector_quantizer_forward.1} parent=77 // pred_fallthru
                _
            $region78: #{vector_quantizer_forward.1} parent=73 // pred_fallthru
              _
            // Predicated region
            $region79: #{vector_quantizer_forward.1} parent=73 // pred_check
              _
            $region80: #{vector_quantizer_forward.1} parent=73 // pred_check_branch
              %658 = sbr.rel target = $region82
            $region81: #{vector_quantizer_forward.1} parent=73 // pred_region
              loop: start=0, step=1, limit=1
              $region83: #{vector_quantizer_forward.1} parent=81 // loop_pre_header
                _
              $region84: #{vector_quantizer_forward.1} parent=81 // loop_header
                %s661 = sphi 0, %s665
                %p662 = scmp.ge.s32.totalorder %s661, 1
                %s666 = sphi %s638, %s638
                %s667 = sphi %s652, %s652
              $region85: #{vector_quantizer_forward.1} parent=81 // loop_header_branch
                %664 = sbr.rel (%p662) target = $region89
              $region86: #{vector_quantizer_forward.1} parent=81 // loop_body
                %v668 = vld [vmem:[%s666] sm:$0xff]
                %669 = vst [vmem:[%s667] sm:$0xff] %v668
                %v670 = vld [vmem:[%s666 + $0x8] sm:$0xff]
                %671 = vst [vmem:[%s667 + $0x10] sm:$0xff] %v670
              $region87: #{vector_quantizer_forward.1} parent=81 // loop_footer
                %s665 = sadd.s32 1, %s661
              $region88: #{vector_quantizer_forward.1} parent=81 // loop_footer_branch
                %660 = sbr.rel target = $region84
              $region89: #{vector_quantizer_forward.1} parent=81 // loop_exit
                _
            $region82: #{vector_quantizer_forward.1} parent=73 // pred_fallthru
              _
          $region74: #{vector_quantizer_forward.1} parent=69 // pred_fallthru
            _
          %688 = vnop
        $region70: #{vector_quantizer_forward.1} parent=61 // pred_fallthru
          _
        // Predicated region
        $region105: #{vector_quantizer_forward.1} parent=61 // pred_check
          %p689 = pneg %p124
        $region106: #{vector_quantizer_forward.1} parent=61 // pred_check_branch
          %691 = sbr.rel (%p689) target = $region108
        $region107: #{vector_quantizer_forward.1} parent=61 // pred_region
          _
        $region108: #{vector_quantizer_forward.1} parent=61 // pred_fallthru
          _
      $region62: #{vector_quantizer_forward.1} parent=5 // pred_fallthru
        _
      %p692 = scmp.le.s32.totalorder 2, %s10
      // Predicated region
      $region109: #{vector_quantizer_forward.1} parent=5 // pred_check
        %p693 = pneg %p692
      $region110: #{vector_quantizer_forward.1} parent=5 // pred_check_branch
        %695 = sbr.rel (%p693) target = $region112
      $region111: #{vector_quantizer_forward.1} parent=5 // pred_region
        %s696 = ssub.s32 %s10, 2
        // Predicated region
        $region113: #{vector_quantizer_forward.1} parent=111 // pred_check
          %p697 = pneg %p102
        $region114: #{vector_quantizer_forward.1} parent=111 // pred_check_branch
          %699 = sbr.rel (%p697) target = $region116
        $region115: #{vector_quantizer_forward.1} parent=111 // pred_region
          %s700 = sand.u32 %s87, 1
          %s701 = sand.u32 %s87, 1
          %s702 = smul.addr %s701, 16
          %s703 = scalar_lea.vmem [#allocation3], %s702
        $region116: #{vector_quantizer_forward.1} parent=111 // pred_fallthru
          _
        // Predicated region
        $region117: #{vector_quantizer_forward.1} parent=111 // pred_check
          %p704 = pneg %p130
        $region118: #{vector_quantizer_forward.1} parent=111 // pred_check_branch
          %706 = sbr.rel (%p704) target = $region120
        $region119: #{vector_quantizer_forward.1} parent=111 // pred_region
          %p707 = scmp.lt.s32.totalorder %s21, 1
          %s708 = scalar_select %p707, %s21, 1
          %p709 = scmp.lt.s32.totalorder %s22, 1
          %s710 = scalar_select %p709, %s22, 1
          %s711 = smul.addr %s708, 2
          %s712 = sadd.s32 %s710, %s711
          %s713 = scalar_lea.vmem %s3, %s712
        $region120: #{vector_quantizer_forward.1} parent=111 // pred_fallthru
          _
      $region112: #{vector_quantizer_forward.1} parent=5 // pred_fallthru
        _
    $region6: #{vector_quantizer_forward.1} parent=1 // loop_footer
      %s14 = sadd.s32 1, %s10
    $region7: #{vector_quantizer_forward.1} parent=1 // loop_footer_branch
      %9 = sbr.rel target = $region3
    $region8: #{vector_quantizer_forward.1} parent=1 // loop_exit
      _

</llo_original>
